<compile_context>
chip_gen: v7x
topology: tpu7x:2x2x1
jax: 0.10.0
libtpu: 0.0.40
codegen_flags: <defaults>
</compile_context>

<pallas_src>
import math

import jax
import jax.numpy as jnp
from jax.experimental import pallas as pl
from jax.experimental.pallas import tpu as pltpu


_MAX_LANE = 2048          # cap on the lane-dense last dim (multiple of 128)
_VMEM_LIMIT = 32 * 1024 * 1024


def _block_bytes():
    """~4 MiB blocks on v7x, ~2 MiB on v5e/v6e."""
    try:
        kind = jax.devices()[0].device_kind.lower()
    except Exception:  # pragma: no cover - defensive
        kind = ""
    return 4 * 1024 * 1024 if "v7" in kind else 2 * 1024 * 1024


_BLOCK_BYTES = _block_bytes()


def _choose_layout(M):
    """Pick (lane, padded_M): lane is the largest multiple-of-128 divisor of M.

    Falls back to padding (extra HBM pass) only when no such divisor exists.
    """
    best = 0
    for lane in range(128, min(M, _MAX_LANE) + 1, 128):
        if M % lane == 0:
            best = lane
    if best:
        return best, M
    lane = 512 if M >= 512 else 128
    return lane, pl.cdiv(M, lane) * lane


def _contrast_kernel(fac_ref, x_ref, o_ref):
    """o = clamp(f*x + (f-1), -1, 1)  ==  clamp(((x+1)/2)*f, 0, 1)*2 - 1."""
    f = fac_ref[...].astype(jnp.float32)           # (tile_rows, 1) per-row factor
    x = x_ref[...].astype(jnp.float32)             # (tile_rows, lane)
    o_ref[...] = jnp.clip(x * f + (f - 1.0), -1.0, 1.0).astype(o_ref.dtype)


@jax.jit
def contrast_forward(image, factors):
    """image: (N, ...) in [-1, 1]; factors: (N,) per-sample contrast factor."""
    orig_shape = image.shape
    orig_dtype = image.dtype
    N = image.shape[0]
    M = math.prod(image.shape[1:])

    lane, padded_M = _choose_layout(M)
    rows_per_sample = padded_M // lane
    R = N * rows_per_sample
    itemsize = jnp.dtype(orig_dtype).itemsize

    flat = image.reshape(N, M)
    if padded_M != M:
        # Fallback only: costs an extra HBM pass, taken only when M has no
        # multiple-of-128 divisor.
        flat = jnp.pad(flat, ((0, 0), (0, padded_M - M)))
    x2 = flat.reshape(R, lane)                      # lane-dense 2-D slab

    # Per-row factor column (row i belongs to sample i // rows_per_sample).
    fac_rows = jnp.broadcast_to(
        factors.astype(jnp.float32)[:, None], (N, rows_per_sample)
    ).reshape(R, 1)

    # Row tile: full extent if small, else a multiple-of-8 chunk of ~block_bytes.
    target_rows = max(8, (_BLOCK_BYTES // (lane * itemsize)) // 8 * 8)
    tile_rows = R if R <= target_rows else target_rows
    grid = (pl.cdiv(R, tile_rows),)

    out2 = pl.pallas_call(
        _contrast_kernel,
        out_shape=jax.ShapeDtypeStruct((R, lane), orig_dtype),
        grid=grid,
        in_specs=[
            pl.BlockSpec((tile_rows, 1), lambda r: (r, 0)),
            pl.BlockSpec((tile_rows, lane), lambda r: (r, 0)),
        ],
        out_specs=pl.BlockSpec((tile_rows, lane), lambda r: (r, 0)),
        compiler_params=pltpu.CompilerParams(
            dimension_semantics=("parallel",),
            vmem_limit_bytes=_VMEM_LIMIT,
        ),
    )(fac_rows, x2)

    out = out2.reshape(N, padded_M)
    if padded_M != M:
        out = out[:, :M]
    return out.reshape(orig_shape)


class Contrast:
    """JAX/Pallas equivalent of the PyTorch Contrast noise layer."""

    def __init__(self, contrast=0.5, p=1):
        self.lower = max(0.0, 1.0 - contrast)
        self.upper = 1.0 + contrast
        # TODO(synk): p<1 (stochastic per-sample apply/skip) not implemented.
        assert p == 1

    def __call__(self, image_cover_mask, key):
        image = image_cover_mask[0]
        N = image.shape[0]
        # Per-batch-element contrast factor, sampled in float32 as kornia does.
        factors = jax.random.uniform(
            key, (N,), dtype=jnp.float32, minval=self.lower, maxval=self.upper)
        return contrast_forward(image, factors)


if __name__ == "__main__":
    key = jax.random.PRNGKey(0)
    k_img, k_fac = jax.random.split(key)

    N, C, H, W = 2, 4, 16, 16
    image = jax.random.uniform(
        k_img, (N, C, H, W), dtype=jnp.float32, minval=-1.0, maxval=1.0)
    cover = image                # unused by forward
    mask = jnp.ones_like(image)  # unused by forward

    layer = Contrast(contrast=0.5, p=1)
    out = layer((image, cover, mask), k_fac)
    out = jax.block_until_ready(out)

    # Reference check in plain JAX (same factors, original formulation).
    factors = jax.random.uniform(
        k_fac, (N,), dtype=jnp.float32, minval=0.5, maxval=1.5)
    ref01 = jnp.clip(((image + 1.0) * 0.5) * factors[:, None, None, None], 0.0, 1.0)
    ref = ref01 * 2.0 - 1.0

    assert out.shape == image.shape and out.dtype == image.dtype
    assert jnp.max(jnp.abs(out - ref)) < 1e-5

    print("KERNEL_OK")
</pallas_src>

<mosaic_0001>
module attributes {stable_mosaic.version = 11 : i64} {
  func.func @_contrast_kernel(%arg0: i32, %arg1: memref<2x1xf32, #tpu.memory_space<vmem>>, %arg2: memref<2x1024xf32, #tpu.memory_space<vmem>>, %arg3: memref<2x1024xf32, #tpu.memory_space<vmem>>) attributes {dimension_semantics = [#tpu.dimension_semantics<parallel>], iteration_bounds = array<i64: 1>, scalar_prefetch = 0 : i64, scratch_operands = 0 : i64, tpu.core_type = #tpu.core_type<tc>, window_params = [{transform_indices = @transform_0, window_bounds = array<i64: 2, 1>}, {transform_indices = @transform_1, window_bounds = array<i64: 2, 1024>}, {transform_indices = @transform_2, window_bounds = array<i64: 2, 1024>}]} {
    %c0 = arith.constant 0 : index
    %c0_0 = arith.constant 0 : index
    %0 = vector.load %arg1[%c0, %c0_0] : memref<2x1xf32, #tpu.memory_space<vmem>>, vector<2x1xf32>
    %c0_1 = arith.constant 0 : index
    %c0_2 = arith.constant 0 : index
    %1 = vector.load %arg2[%c0_1, %c0_2] : memref<2x1024xf32, #tpu.memory_space<vmem>>, vector<2x1024xf32>
    %2 = vector.broadcast %0 : vector<2x1xf32> to vector<2x1024xf32>
    %3 = arith.mulf %1, %2 : vector<2x1024xf32>
    %cst = arith.constant 1.000000e+00 : f32
    %4 = vector.broadcast %cst : f32 to vector<2x1xf32>
    %5 = arith.subf %0, %4 : vector<2x1xf32>
    %6 = vector.broadcast %5 : vector<2x1xf32> to vector<2x1024xf32>
    %7 = arith.addf %3, %6 : vector<2x1024xf32>
    %cst_3 = arith.constant -1.000000e+00 : f32
    %cst_4 = arith.constant 1.000000e+00 : f32
    %8 = vector.broadcast %cst_3 : f32 to vector<2x1024xf32>
    %9 = arith.maximumf %8, %7 : vector<2x1024xf32>
    %10 = vector.broadcast %cst_4 : f32 to vector<2x1024xf32>
    %11 = arith.minimumf %10, %9 : vector<2x1024xf32>
    %c0_5 = arith.constant 0 : index
    %c0_6 = arith.constant 0 : index
    %12 = vector.load %arg3[%c0_5, %c0_6] : memref<2x1024xf32, #tpu.memory_space<vmem>>, vector<2x1024xf32>
    tpu.vector_store %arg3[%c0_5, %c0_6], %11 {strides = array<i32>} : memref<2x1024xf32, #tpu.memory_space<vmem>>, vector<2x1024xf32>,
    return
  }
  func.func @transform_0(%arg0: i32) -> (i32, i32) {
    %c0_i32 = arith.constant 0 : i32
    %c0_i32_0 = arith.constant 0 : i32
    return %arg0, %c0_i32 : i32, i32
  }
  func.func @transform_1(%arg0: i32) -> (i32, i32) {
    %c0_i32 = arith.constant 0 : i32
    %c0_i32_0 = arith.constant 0 : i32
    return %arg0, %c0_i32 : i32, i32
  }
  func.func @transform_2(%arg0: i32) -> (i32, i32) {
    %c0_i32 = arith.constant 0 : i32
    %c0_i32_0 = arith.constant 0 : i32
    return %arg0, %c0_i32 : i32, i32
  }
}

</mosaic_0001>

<llo_original>
// kernel: contrast_forward.1
$region0: #{contrast_forward.1}
  #allocation0 [shape = 'u32[]', space=smem, size = 0x4, offset = 0x4, fixed_abs, tag = 'smem constant byte address 0x4 - core index']
  #allocation1 [shape = 'u32[144,128]{1,0:T(1,128)}', space=vmem, size = 0x12000, scoped, tag = 'internal scratch']
  %s0 = inlined_call_operand.vmem [shape: f32[2,1], index: 0, kind: input, shape index: {}]
  %s1 = inlined_call_operand.vmem [shape: f32[2,1024], index: 1, kind: input, shape index: {}]
  %s2 = inlined_call_operand.vmem [shape: f32[2,1024], index: 2, kind: output, shape index: {}]
  %s3 = sld [smem:[#allocation0]]
  $region18: #{contrast_forward.1} parent=0
    _
  %s5 = ssub.s32 1, %s3
  %s6 = scalar_select 0, %s5, %s3
  // Predicated region
  $region2: #{contrast_forward.1} parent=0 // pred_check
    _
  $region3: #{contrast_forward.1} parent=0 // pred_check_branch
    %8 = sbr.rel (0) target = $region5
  $region4: #{contrast_forward.1} parent=0 // pred_region
    _
  $region5: #{contrast_forward.1} parent=0 // pred_fallthru
    _
  // Predicated region
  $region6: #{contrast_forward.1} parent=0 // pred_check
    _
  $region7: #{contrast_forward.1} parent=0 // pred_check_branch
    %10 = sbr.rel (0) target = $region9
  $region8: #{contrast_forward.1} parent=0 // pred_region
    _
  $region9: #{contrast_forward.1} parent=0 // pred_fallthru
    _
  %v11 = vld [vmem:[%s0] sm:$0x3]
  %v12 = vld [vmem:[%s1] sm:$0xff]
  %v13 = vld [vmem:[%s1 + $0x8] sm:$0xff]
  %15 = vset.pattern.permute.xlu0 0
  %16 = vperm.xlu0 %15, %v11
  %v17 = vpop.permute.xlu0 %16
  %v19 = vunpack.c.l.s4 269488144
  %v20 = vunpack.c.0.s8 %v19
  %v21 = vlaneseq
  %v22 = vshrl.u32 %v21, 7
  %v23 = vsub.s32 %v20, %v22
  %v24 = vrot.slane %v17, %v23
  %v26 = vmul.f32 %v12, %v24
  %v27 = vmul.f32 %v13, %v24
  %v28 = vsub.f32 %v11, 1.0
  %30 = vset.pattern.permute.xlu0 0
  %31 = vperm.xlu0 %30, %v28
  %v32 = vpop.permute.xlu0 %31
  %v34 = vunpack.c.l.s4 269488144
  %v35 = vunpack.c.0.s8 %v34
  %v36 = vlaneseq
  %v37 = vshrl.u32 %v36, 7
  %v38 = vsub.s32 %v35, %v37
  %v39 = vrot.slane %v32, %v38
  %v41 = vadd.f32 %v26, %v39
  %v42 = vadd.f32 %v27, %v39
  %v43 = vmax.f32 %v41, -1.0
  %v44 = vmax.f32 %v42, -1.0
  %v45 = vmin.f32 %v43, 1.0
  %v46 = vmin.f32 %v44, 1.0
  %47 = vst [vmem:[%s2] sm:$0xff] %v45
  %48 = vst [vmem:[%s2 + $0x8] sm:$0xff] %v46
  // Predicated region
  $region10: #{contrast_forward.1} parent=0 // pred_check
    _
  $region11: #{contrast_forward.1} parent=0 // pred_check_branch
    %50 = sbr.rel (0) target = $region13
  $region12: #{contrast_forward.1} parent=0 // pred_region
    _
  $region13: #{contrast_forward.1} parent=0 // pred_fallthru
    _
  // Predicated region
  $region14: #{contrast_forward.1} parent=0 // pred_check
    _
  $region15: #{contrast_forward.1} parent=0 // pred_check_branch
    %52 = sbr.rel (0) target = $region17
  $region16: #{contrast_forward.1} parent=0 // pred_region
    _
  $region17: #{contrast_forward.1} parent=0 // pred_fallthru
    _

</llo_original>
